<compile_context>
chip_gen: v7x
topology: tpu7x:2x2x1
jax: 0.10.0
libtpu: 0.0.40
codegen_flags: <defaults>
</compile_context>

<pallas_src>
import functools

import jax
import jax.numpy as jnp
from jax.experimental import pallas as pl
from jax.experimental.pallas import tpu as pltpu


def _fused_gcn_kernel(a_ref, w_ref, b_ref, h0_ref, out_ref, h_sc, *, residual):
    """One grid step == one GCN layer. h_sc (VMEM f32) carries h across layers."""
    layer = pl.program_id(0)
    n = h_sc.shape[0]

    @pl.when(layer == 0)
    def _():
        h_sc[...] = h0_ref[...]

    # bf16 operands for the MXU, f32 accumulation.
    h_bf16 = h_sc[...].astype(jnp.bfloat16)

    # Both aggregations ([A_ppi; A_self] @ h) as a single matmul when residual=True.
    agg = jnp.dot(a_ref[...], h_bf16, preferred_element_type=jnp.float32)
    if residual:
        ppi_out = agg[:n, :]
        res = agg[n:, :]
    else:
        ppi_out = agg

    z = jnp.dot(ppi_out.astype(jnp.bfloat16), w_ref[...],
                preferred_element_type=jnp.float32) + b_ref[...]
    h_new = jnp.maximum(z, 0.0)
    if residual:
        h_new = h_new + res
    h_sc[...] = h_new

    @pl.when(layer == pl.num_programs(0) - 1)
    def _():
        out_ref[...] = h_sc[...]


def gcn_net_forward(a_ppi_blocks, a_self_blocks, h, weights, biases, residual=True):
    """GcnNet.forward: L NodeUpdate layers fused into one pallas_call.

    a_ppi_blocks / a_self_blocks: lists of (N, N) dense weighted adjacencies
    h: (N, D) node features;  weights[i]: (D, D) stored as W^T;  biases[i]: (D,)
    """
    num_layers = len(weights)
    if num_layers == 0:
        return h

    n_nodes, d = h.shape

    # Stack per-layer operands so the layer index becomes a grid axis.
    if residual:
        a_stacked = jnp.stack(
            [jnp.concatenate([a_ppi_blocks[i], a_self_blocks[i]], axis=0)
             for i in range(num_layers)], axis=0).astype(jnp.bfloat16)   # (L, 2N, N)
        rows = 2 * n_nodes
    else:
        a_stacked = jnp.stack(a_ppi_blocks, axis=0).astype(jnp.bfloat16)  # (L, N, N)
        rows = n_nodes
    w_stacked = jnp.stack(weights, axis=0).astype(jnp.bfloat16)           # (L, D, D)
    b_stacked = jnp.stack([b.reshape(1, d) for b in biases],
                          axis=0).astype(jnp.float32)                     # (L, 1, D)

    kernel = functools.partial(_fused_gcn_kernel, residual=residual)

    return pl.pallas_call(
        kernel,
        out_shape=jax.ShapeDtypeStruct((n_nodes, d), jnp.float32),
        grid=(num_layers,),
        in_specs=[
            pl.BlockSpec((None, rows, n_nodes), lambda i: (i, 0, 0)),   # A[i]
            pl.BlockSpec((None, d, d), lambda i: (i, 0, 0)),            # W[i]
            pl.BlockSpec((None, 1, d), lambda i: (i, 0, 0)),            # b[i]
            pl.BlockSpec((n_nodes, d), lambda i: (0, 0)),               # h0 (layer 0 only)
        ],
        out_specs=pl.BlockSpec((n_nodes, d), lambda i: (0, 0)),         # resident output
        scratch_shapes=[pltpu.VMEM((n_nodes, d), jnp.float32)],         # resident h state
        compiler_params=pltpu.CompilerParams(
            dimension_semantics=("arbitrary",)),                        # layers are sequential
    )(a_stacked, w_stacked, b_stacked, h.astype(jnp.float32))


def _reference(a_ppi_blocks, a_self_blocks, h, weights, biases, residual=True):
    """Pure-JAX reference emulating the kernel's bf16-input / f32-accum matmuls."""
    for i in range(len(weights)):
        hb = h.astype(jnp.bfloat16)
        ppi = jnp.dot(a_ppi_blocks[i].astype(jnp.bfloat16), hb,
                      preferred_element_type=jnp.float32)
        z = jnp.dot(ppi.astype(jnp.bfloat16), weights[i].astype(jnp.bfloat16),
                    preferred_element_type=jnp.float32) + biases[i][None, :]
        z = jnp.maximum(z, 0.0)
        if residual:
            z = z + jnp.dot(a_self_blocks[i].astype(jnp.bfloat16), hb,
                            preferred_element_type=jnp.float32)
        h = z
    return h


if __name__ == "__main__":
    key = jax.random.PRNGKey(0)
    num_nodes = 16       # nodes per block (src == dst for simplicity; multiple of 8)
    hidden = 128         # hidden_size — lane-dense (multiple of 128)
    num_gcn = 3
    residual = True

    keys = jax.random.split(key, 1 + 4 * num_gcn)
    h0 = jax.random.normal(keys[0], (num_nodes, hidden), dtype=jnp.float32)

    a_ppi_blocks, a_self_blocks, weights, biases = [], [], [], []
    xavier_bound = (6.0 / (hidden + hidden)) ** 0.5           # xavier_uniform_
    bias_bound = 1.0 / (hidden ** 0.5)                        # nn.Linear default bias init
    for i in range(num_gcn):
        k_ap, k_as, k_w, k_b = keys[1 + 4 * i: 1 + 4 * (i + 1)]
        # dense weighted adjacencies standing in for DGL blocks' 'ppi' / 'self' edge weights
        a_ppi_blocks.append(jax.random.uniform(k_ap, (num_nodes, num_nodes),
                                               dtype=jnp.float32) / num_nodes)
        a_self_blocks.append(jax.random.uniform(k_as, (num_nodes, num_nodes),
                                                dtype=jnp.float32) / num_nodes)
        # weight stored as (in, out) == W^T of the PyTorch nn.Linear weight
        weights.append(jax.random.uniform(k_w, (hidden, hidden), dtype=jnp.float32,
                                          minval=-xavier_bound, maxval=xavier_bound))
        biases.append(jax.random.uniform(k_b, (hidden,), dtype=jnp.float32,
                                         minval=-bias_bound, maxval=bias_bound))

    out = gcn_net_forward(a_ppi_blocks, a_self_blocks, h0, weights, biases,
                          residual=residual)
    out = jax.block_until_ready(out)

    ref = _reference(a_ppi_blocks, a_self_blocks, h0, weights, biases,
                     residual=residual)
    assert out.shape == (num_nodes, hidden)
    assert bool(jnp.allclose(out, ref, atol=3e-2, rtol=3e-2)), "mismatch vs reference"

    print("KERNEL_OK")
</pallas_src>

<mosaic_0001>
module attributes {stable_mosaic.version = 11 : i64} {
  func.func @_fused_gcn_kernel(%arg0: i32, %arg1: memref<1x32x16xbf16, #tpu.memory_space<vmem>>, %arg2: memref<1x128x128xbf16, #tpu.memory_space<vmem>>, %arg3: memref<1x1x128xf32, #tpu.memory_space<vmem>>, %arg4: memref<16x128xf32, #tpu.memory_space<vmem>>, %arg5: memref<16x128xf32, #tpu.memory_space<vmem>>, %arg6: memref<16x128xf32, #tpu.memory_space<vmem>>) attributes {dimension_semantics = [#tpu.dimension_semantics<arbitrary>], iteration_bounds = array<i64: 3>, scalar_prefetch = 0 : i64, scratch_operands = 1 : i64, tpu.core_type = #tpu.core_type<tc>, window_params = [{transform_indices = @transform_0, window_bounds = array<i64: 1, 32, 16>}, {transform_indices = @transform_1, window_bounds = array<i64: 1, 128, 128>}, {transform_indices = @transform_2, window_bounds = array<i64: 1, 1, 128>}, {pipeline_mode = #tpu.pipeline_mode<synchronous>, transform_indices = @transform_3, window_bounds = array<i64: 16, 128>}, {pipeline_mode = #tpu.pipeline_mode<synchronous>, transform_indices = @transform_4, window_bounds = array<i64: 16, 128>}]} {
    %c0_i32 = arith.constant 0 : i32
    %0 = arith.cmpi eq, %arg0, %c0_i32 : i32
    %1 = arith.extui %0 : i1 to i32
    %c0_i32_0 = arith.constant 0 : i32
    %2 = arith.cmpi ne, %1, %c0_i32_0 : i32
    scf.if %2 {
      %c0_16 = arith.constant 0 : index
      %c0_17 = arith.constant 0 : index
      %25 = vector.load %arg4[%c0_16, %c0_17] : memref<16x128xf32, #tpu.memory_space<vmem>>, vector<16x128xf32>
      %c0_18 = arith.constant 0 : index
      %c0_19 = arith.constant 0 : index
      %26 = vector.load %arg6[%c0_18, %c0_19] : memref<16x128xf32, #tpu.memory_space<vmem>>, vector<16x128xf32>
      tpu.vector_store %arg6[%c0_18, %c0_19], %25 {strides = array<i32>} : memref<16x128xf32, #tpu.memory_space<vmem>>, vector<16x128xf32>,
    } else {
    }
    %c0 = arith.constant 0 : index
    %c0_1 = arith.constant 0 : index
    %3 = vector.load %arg6[%c0, %c0_1] : memref<16x128xf32, #tpu.memory_space<vmem>>, vector<16x128xf32>
    %4 = arith.truncf %3 : vector<16x128xf32> to vector<16x128xbf16>
    %c0_2 = arith.constant 0 : index
    %c0_3 = arith.constant 0 : index
    %c0_4 = arith.constant 0 : index
    %5 = vector.load %arg1[%c0_2, %c0_3, %c0_4] : memref<1x32x16xbf16, #tpu.memory_space<vmem>>, vector<1x32x16xbf16>
    %6 = vector.shape_cast %5 : vector<1x32x16xbf16> to vector<32x16xbf16>
    %cst = arith.constant dense<0.000000e+00> : vector<32x128xf32>
    %7 = tpu.matmul %6, %4, %cst {dimension_numbers = #tpu.dot_dimension_numbers<[1], [0], [0], [1], [0, 0, 1, 1], [], []>} : vector<32x16xbf16>, vector<16x128xbf16>, vector<32x128xf32> -> vector<32x128xf32>
    %8 = vector.extract_strided_slice %7 {offsets = [0, 0], sizes = [16, 128], strides = [1, 1]} : vector<32x128xf32> to vector<16x128xf32>
    %9 = vector.extract_strided_slice %7 {offsets = [16, 0], sizes = [16, 128], strides = [1, 1]} : vector<32x128xf32> to vector<16x128xf32>
    %10 = arith.truncf %8 : vector<16x128xf32> to vector<16x128xbf16>
    %c0_5 = arith.constant 0 : index
    %c0_6 = arith.constant 0 : index
    %c0_7 = arith.constant 0 : index
    %11 = vector.load %arg2[%c0_5, %c0_6, %c0_7] : memref<1x128x128xbf16, #tpu.memory_space<vmem>>, vector<1x128x128xbf16>
    %12 = vector.shape_cast %11 : vector<1x128x128xbf16> to vector<128x128xbf16>
    %cst_8 = arith.constant dense<0.000000e+00> : vector<16x128xf32>
    %13 = tpu.matmul %10, %12, %cst_8 {dimension_numbers = #tpu.dot_dimension_numbers<[1], [0], [0], [1], [0, 0, 1, 1], [], []>} : vector<16x128xbf16>, vector<128x128xbf16>, vector<16x128xf32> -> vector<16x128xf32>
    %c0_9 = arith.constant 0 : index
    %c0_10 = arith.constant 0 : index
    %c0_11 = arith.constant 0 : index
    %14 = vector.load %arg3[%c0_9, %c0_10, %c0_11] : memref<1x1x128xf32, #tpu.memory_space<vmem>>, vector<1x1x128xf32>
    %15 = vector.shape_cast %14 : vector<1x1x128xf32> to vector<1x128xf32>
    %16 = vector.broadcast %15 : vector<1x128xf32> to vector<16x128xf32>
    %17 = arith.addf %13, %16 : vector<16x128xf32>
    %cst_12 = arith.constant 0.000000e+00 : f32
    %18 = vector.broadcast %cst_12 : f32 to vector<16x128xf32>
    %19 = arith.maximumf %17, %18 : vector<16x128xf32>
    %20 = arith.addf %19, %9 : vector<16x128xf32>
    %c0_13 = arith.constant 0 : index
    %c0_14 = arith.constant 0 : index
    %21 = vector.load %arg6[%c0_13, %c0_14] : memref<16x128xf32, #tpu.memory_space<vmem>>, vector<16x128xf32>
    tpu.vector_store %arg6[%c0_13, %c0_14], %20 {strides = array<i32>} : memref<16x128xf32, #tpu.memory_space<vmem>>, vector<16x128xf32>,
    %c2_i32 = arith.constant 2 : i32
    %22 = arith.cmpi eq, %arg0, %c2_i32 : i32
    %23 = arith.extui %22 : i1 to i32
    %c0_i32_15 = arith.constant 0 : i32
    %24 = arith.cmpi ne, %23, %c0_i32_15 : i32
    scf.if %24 {
      %c0_16 = arith.constant 0 : index
      %c0_17 = arith.constant 0 : index
      %25 = vector.load %arg6[%c0_16, %c0_17] : memref<16x128xf32, #tpu.memory_space<vmem>>, vector<16x128xf32>
      %c0_18 = arith.constant 0 : index
      %c0_19 = arith.constant 0 : index
      %26 = vector.load %arg5[%c0_18, %c0_19] : memref<16x128xf32, #tpu.memory_space<vmem>>, vector<16x128xf32>
      tpu.vector_store %arg5[%c0_18, %c0_19], %25 {strides = array<i32>} : memref<16x128xf32, #tpu.memory_space<vmem>>, vector<16x128xf32>,
    } else {
    }
    return
  }
  func.func @transform_0(%arg0: i32) -> (i32, i32, i32) {
    %c0_i32 = arith.constant 0 : i32
    %c0_i32_0 = arith.constant 0 : i32
    %c0_i32_1 = arith.constant 0 : i32
    return %arg0, %c0_i32, %c0_i32_0 : i32, i32, i32
  }
  func.func @transform_1(%arg0: i32) -> (i32, i32, i32) {
    %c0_i32 = arith.constant 0 : i32
    %c0_i32_0 = arith.constant 0 : i32
    %c0_i32_1 = arith.constant 0 : i32
    return %arg0, %c0_i32, %c0_i32_0 : i32, i32, i32
  }
  func.func @transform_2(%arg0: i32) -> (i32, i32, i32) {
    %c0_i32 = arith.constant 0 : i32
    %c0_i32_0 = arith.constant 0 : i32
    %c0_i32_1 = arith.constant 0 : i32
    return %arg0, %c0_i32, %c0_i32_0 : i32, i32, i32
  }
  func.func @transform_3(%arg0: i32) -> (i32, i32) {
    %c0_i32 = arith.constant 0 : i32
    %c0_i32_0 = arith.constant 0 : i32
    %c0_i32_1 = arith.constant 0 : i32
    return %c0_i32, %c0_i32_0 : i32, i32
  }
  func.func @transform_4(%arg0: i32) -> (i32, i32) {
    %c0_i32 = arith.constant 0 : i32
    %c0_i32_0 = arith.constant 0 : i32
    %c0_i32_1 = arith.constant 0 : i32
    return %c0_i32, %c0_i32_0 : i32, i32
  }
}

</mosaic_0001>

<llo_original>
// kernel: tpu_custom_call.1
$region0: #{tpu_custom_call.1}
  #allocation0 [shape = 'u32[]', space=smem, size = 0x4, offset = 0x4, fixed_abs, tag = 'smem constant byte address 0x4 - core index']
  #allocation1 [shape = 'u32[144,128]{1,0:T(1,128)}', space=vmem, size = 0x12000, scoped, tag = 'internal scratch']
  #allocation2 [shape = 'f32[16,128]{1,0:T(8,128)}', space=vmem, size = 0x2000, scoped, tag = 'scratch operand']
  %s0 = inlined_call_operand.vmem [shape: bf16[3,32,16], index: 0, kind: input, shape index: {}]
  %s1 = inlined_call_operand.hbm [shape: bf16[3,128,128], index: 1, kind: input, shape index: {}]
  %s2 = inlined_call_operand.vmem [shape: f32[3,1,128], index: 2, kind: input, shape index: {}]
  %s3 = inlined_call_operand.vmem [shape: f32[16,128], index: 3, kind: input, shape index: {}]
  %s4 = inlined_call_operand.hbm [shape: f32[16,128], index: 4, kind: output, shape index: {}]
  %s5 = sld [smem:[#allocation0]]
  $region61: #{tpu_custom_call.1} parent=0
    _
  %s7 = ssub.s32 1, %s5
  %s8 = scalar_select 0, %s7, %s5
  $region1: #{tpu_custom_call.1} parent=0
    #allocation3 [shape = 'u8[65536]{0}', space=vmem, size = 0x10000, scoped, tag = 'input window, operand 1']
    #allocation4 [shape = 's32[2]{0}', space=sflag, size = 0x8, scoped, tag = 'scoped memory for tpu_custom_call.1']
    #allocation5 [shape = 's32[2]{0}', space=sflag, size = 0x8, scoped, tag = 'scoped memory for tpu_custom_call.1']
    #allocation6 [shape = 'u8[8192]{0}', space=vmem, size = 0x2000, scoped, tag = 'output window, operand 0, single buffered']
    %9 = vsyncpa [#allocation4], 0
    %s10 = scalar_lea.sflag [#allocation4], 1
    %11 = vsyncpa %s10, 0
    %12 = vsyncpa [#allocation5], 0
    loop: start=0, step=1, limit=5
    $region2: #{tpu_custom_call.1} parent=1 // loop_pre_header
      _
    $region3: #{tpu_custom_call.1} parent=1 // loop_header
      %s14 = sphi 0, %s18
      %p15 = scmp.ge.s32.totalorder %s14, 5
      %s24 = sphi 0, %s26
      %s27 = sphi 0, %s24
      %s28 = sphi 0, %s27
      %s44 = sphi 0, %s28
      %s50 = sphi 0, %s52
      %s53 = sphi 0, %s50
      %s54 = sphi 0, %s53
      %s70 = sphi 0, %s54
      %s76 = sphi 0, %s78
      %s79 = sphi 0, %s76
      %s80 = sphi 0, %s79
      %s96 = sphi 0, %s80
      %s100 = sphi 0, %s100
      %s102 = sphi 0, %s100
      %s103 = sphi 0, %s102
      %s117 = sphi 0, %s103
      %s121 = sphi 0, %s121
      %s123 = sphi 0, %s121
      %s124 = sphi 0, %s123
      %s138 = sphi 0, %s124
    $region4: #{tpu_custom_call.1} parent=1 // loop_header_branch
      %17 = sbr.rel (%p15) target = $region8
    $region5: #{tpu_custom_call.1} parent=1 // loop_body
      %s19 = ssub.s32 %s14, 1
      %s20 = ssub.s32 %s14, 2
      %s21 = sadd.s32 %s14, 1
      %s22 = ssub.s32 %s14, %s21
      %p23 = scmp.eq.s32.totalorder %s22, 0
      %s25 = sadd.s32 %s24, 1
      %s26 = scalar_select %p23, %s24, %s25
      %p29 = pneg %p23
      %p30 = scmp.eq.s32.totalorder %s14, 2
      %p31 = por %p29, %p30
      %p32 = scmp.ne.s32.totalorder %s24, %s27
      %p33 = scmp.eq.s32.totalorder %s14, 0
      %p34 = por %p32, %p33
      %p35 = scmp.ne.s32.totalorder %s24, %s27
      %p36 = scmp.eq.s32.totalorder %s19, 2
      %p37 = por %p35, %p36
      %p38 = scmp.ne.s32.totalorder %s27, %s28
      %p39 = scmp.eq.s32.totalorder %s19, 0
      %p40 = por %p38, %p39
      %p41 = scmp.ne.s32.totalorder %s27, %s28
      %p42 = scmp.eq.s32.totalorder %s20, 2
      %p43 = por %p41, %p42
      %p45 = scmp.ne.s32.totalorder %s28, %s44
      %p46 = scmp.eq.s32.totalorder %s20, 0
      %p47 = por %p45, %p46
      %s48 = ssub.s32 %s14, %s21
      %p49 = scmp.eq.s32.totalorder %s48, 0
      %s51 = sadd.s32 %s50, 1
      %s52 = scalar_select %p49, %s50, %s51
      %p55 = pneg %p49
      %p56 = scmp.eq.s32.totalorder %s14, 2
      %p57 = por %p55, %p56
      %p58 = scmp.ne.s32.totalorder %s50, %s53
      %p59 = scmp.eq.s32.totalorder %s14, 0
      %p60 = por %p58, %p59
      %p61 = scmp.ne.s32.totalorder %s50, %s53
      %p62 = scmp.eq.s32.totalorder %s19, 2
      %p63 = por %p61, %p62
      %p64 = scmp.ne.s32.totalorder %s53, %s54
      %p65 = scmp.eq.s32.totalorder %s19, 0
      %p66 = por %p64, %p65
      %p67 = scmp.ne.s32.totalorder %s53, %s54
      %p68 = scmp.eq.s32.totalorder %s20, 2
      %p69 = por %p67, %p68
      %p71 = scmp.ne.s32.totalorder %s54, %s70
      %p72 = scmp.eq.s32.totalorder %s20, 0
      %p73 = por %p71, %p72
      %s74 = ssub.s32 %s14, %s21
      %p75 = scmp.eq.s32.totalorder %s74, 0
      %s77 = sadd.s32 %s76, 1
      %s78 = scalar_select %p75, %s76, %s77
      %p81 = pneg %p75
      %p82 = scmp.eq.s32.totalorder %s14, 2
      %p83 = por %p81, %p82
      %p84 = scmp.ne.s32.totalorder %s76, %s79
      %p85 = scmp.eq.s32.totalorder %s14, 0
      %p86 = por %p84, %p85
      %p87 = scmp.ne.s32.totalorder %s76, %s79
      %p88 = scmp.eq.s32.totalorder %s19, 2
      %p89 = por %p87, %p88
      %p90 = scmp.ne.s32.totalorder %s79, %s80
      %p91 = scmp.eq.s32.totalorder %s19, 0
      %p92 = por %p90, %p91
      %p93 = scmp.ne.s32.totalorder %s79, %s80
      %p94 = scmp.eq.s32.totalorder %s20, 2
      %p95 = por %p93, %p94
      %p97 = scmp.ne.s32.totalorder %s80, %s96
      %p98 = scmp.eq.s32.totalorder %s20, 0
      %p99 = por %p97, %p98
      %s101 = sadd.s32 %s100, 1
      %p104 = scmp.eq.s32.totalorder %s14, 2
      %p105 = scmp.ne.s32.totalorder %s100, %s102
      %p106 = scmp.eq.s32.totalorder %s14, 0
      %p107 = por %p105, %p106
      %p108 = scmp.ne.s32.totalorder %s100, %s102
      %p109 = scmp.eq.s32.totalorder %s19, 2
      %p110 = por %p108, %p109
      %p111 = scmp.ne.s32.totalorder %s102, %s103
      %p112 = scmp.eq.s32.totalorder %s19, 0
      %p113 = por %p111, %p112
      %p114 = scmp.ne.s32.totalorder %s102, %s103
      %p115 = scmp.eq.s32.totalorder %s20, 2
      %p116 = por %p114, %p115
      %p118 = scmp.ne.s32.totalorder %s103, %s117
      %p119 = scmp.eq.s32.totalorder %s20, 0
      %p120 = por %p118, %p119
      %s122 = sadd.s32 %s121, 1
      %p125 = scmp.eq.s32.totalorder %s14, 2
      %p126 = scmp.ne.s32.totalorder %s121, %s123
      %p127 = scmp.eq.s32.totalorder %s14, 0
      %p128 = por %p126, %p127
      %p129 = scmp.ne.s32.totalorder %s121, %s123
      %p130 = scmp.eq.s32.totalorder %s19, 2
      %p131 = por %p129, %p130
      %p132 = scmp.ne.s32.totalorder %s123, %s124
      %p133 = scmp.eq.s32.totalorder %s19, 0
      %p134 = por %p132, %p133
      %p135 = scmp.ne.s32.totalorder %s123, %s124
      %p136 = scmp.eq.s32.totalorder %s20, 2
      %p137 = por %p135, %p136
      %p139 = scmp.ne.s32.totalorder %s124, %s138
      %p140 = scmp.eq.s32.totalorder %s20, 0
      %p141 = por %p139, %p140
      %p142 = scmp.le.s32.totalorder 1, %s14
      %p143 = scmp.lt.s32.totalorder %s14, 4
      %p144 = pnand %p142, %p143
      %p145 = pneg %p144
      // Predicated region
      $region9: #{tpu_custom_call.1} parent=5 // pred_check
        _
      $region10: #{tpu_custom_call.1} parent=5 // pred_check_branch
        %147 = sbr.rel (%p144) target = $region12
      $region11: #{tpu_custom_call.1} parent=5 // pred_region
        %s148 = ssub.s32 %s14, 1
        // Predicated region
        $region13: #{tpu_custom_call.1} parent=11 // pred_check
          %p149 = pneg %p113
        $region14: #{tpu_custom_call.1} parent=11 // pred_check_branch
          %151 = sbr.rel (%p149) target = $region16
        $region15: #{tpu_custom_call.1} parent=11 // pred_region
          _
        $region16: #{tpu_custom_call.1} parent=11 // pred_fallthru
          _
      $region12: #{tpu_custom_call.1} parent=5 // pred_fallthru
        _
      %p152 = scmp.lt.s32.totalorder %s14, 3
      // Predicated region
      $region17: #{tpu_custom_call.1} parent=5 // pred_check
        %p153 = pneg %p152
      $region18: #{tpu_custom_call.1} parent=5 // pred_check_branch
        %155 = sbr.rel (%p153) target = $region20
      $region19: #{tpu_custom_call.1} parent=5 // pred_region
        // Predicated region
        $region21: #{tpu_custom_call.1} parent=19 // pred_check
          %p156 = pneg %p34
        $region22: #{tpu_custom_call.1} parent=19 // pred_check_branch
          %158 = sbr.rel (%p156) target = $region24
        $region23: #{tpu_custom_call.1} parent=19 // pred_region
          %p159 = scmp.lt.s32.totalorder %s14, 2
          %s160 = scalar_select %p159, %s14, 2
          %s161 = smul.addr %s160, 4
          %s162 = smul.addr %s161, 4
          %s163 = scalar_lea.vmem %s0, %s162
        $region24: #{tpu_custom_call.1} parent=19 // pred_fallthru
          _
        // Predicated region
        $region25: #{tpu_custom_call.1} parent=19 // pred_check
          %p164 = pneg %p60
        $region26: #{tpu_custom_call.1} parent=19 // pred_check_branch
          %166 = sbr.rel (%p164) target = $region28
        $region27: #{tpu_custom_call.1} parent=19 // pred_region
          %s167 = sand.u32 %s50, 1
          %s168 = scalar_lea.sflag [#allocation4], %s167
          %s169 = sand.u32 %s50, 1
          %s170 = smul.addr %s169, 64
          %s171 = scalar_lea.vmem [#allocation3], %s170
          %s173 = ssub.s32 1024, 1024
          %174 = vsyncadd %s168, %s173
          %s175 = smul.addr %s14, 16
          %s176 = smul.addr %s175, 64
          %s177 = scalar_lea.hbm %s1, %s176
          %s178 = sshll.u32 %s171, 4
          %s179 = int_to_ptr.vmem [resolvable:$true] %s178
          %184 = dma.hbm_to_vmem [thread:$0]  %s177, 1024, %s179, %s168, 64, 64, 4
        $region28: #{tpu_custom_call.1} parent=19 // pred_fallthru
          _
        // Predicated region
        $region29: #{tpu_custom_call.1} parent=19 // pred_check
          %p185 = pneg %p86
        $region30: #{tpu_custom_call.1} parent=19 // pred_check_branch
          %187 = sbr.rel (%p185) target = $region32
        $region31: #{tpu_custom_call.1} parent=19 // pred_region
          %p188 = scmp.lt.s32.totalorder %s14, 2
          %s189 = scalar_select %p188, %s14, 2
          %s190 = scalar_lea.vmem %s2, %s189
        $region32: #{tpu_custom_call.1} parent=19 // pred_fallthru
          _
      $region20: #{tpu_custom_call.1} parent=5 // pred_fallthru
        _
      %p191 = scmp.le.s32.totalorder 1, %s14
      %p192 = scmp.lt.s32.totalorder %s14, 4
      %p193 = pnand %p191, %p192
      %p194 = pneg %p193
      // Predicated region
      $region33: #{tpu_custom_call.1} parent=5 // pred_check
        _
      $region34: #{tpu_custom_call.1} parent=5 // pred_check_branch
        %196 = sbr.rel (%p193) target = $region36
      $region35: #{tpu_custom_call.1} parent=5 // pred_region
        %s197 = ssub.s32 %s14, 1
        %s198 = sand.u32 %s53, 1
        %s199 = scalar_lea.sflag [#allocation4], %s198
        %s200 = sand.u32 %s53, 1
        %s201 = smul.addr %s200, 64
        %s202 = scalar_lea.vmem [#allocation3], %s201
        // Predicated region
        $region37: #{tpu_custom_call.1} parent=35 // pred_check
          %p203 = pneg %p66
        $region38: #{tpu_custom_call.1} parent=35 // pred_check_branch
          %205 = sbr.rel (%p203) target = $region40
        $region39: #{tpu_custom_call.1} parent=35 // pred_region
          %206 = dma.done %s199, 1024
        $region40: #{tpu_custom_call.1} parent=35 // pred_fallthru
          _
        %p207 = scmp.lt.s32.totalorder %s19, 2
        %s208 = scalar_select %p207, %s19, 2
        %s209 = smul.addr %s208, 4
        %s210 = smul.addr %s209, 4
        %s211 = scalar_lea.vmem %s0, %s210
        %p212 = pneg %p40
        %p213 = pneg %p37
        %s214 = sand.u32 %s53, 1
        %s215 = scalar_lea.sflag [#allocation4], %s214
        %s216 = sand.u32 %s53, 1
        %s217 = smul.addr %s216, 64
        %s218 = scalar_lea.vmem [#allocation3], %s217
        %p219 = pneg %p66
        %p220 = pneg %p63
        %p221 = scmp.lt.s32.totalorder %s19, 2
        %s222 = scalar_select %p221, %s19, 2
        %s223 = scalar_lea.vmem %s2, %s222
        %p224 = pneg %p92
        %p225 = pneg %p89
        %p226 = pneg %p113
        %p227 = pneg %p110
        %p228 = pneg %p134
        %p229 = pneg %p131
        %p230 = scmp.lt.s32.totalorder %s19, 2
        %s231 = scalar_select %p230, %s19, 2
        %s232 = smul.addr %s231, 4
        %s233 = smul.addr %s232, 4
        %s234 = scalar_lea.vmem %s0, %s233
        %p235 = scmp.lt.s32.totalorder %s19, 2
        %s236 = scalar_select %p235, %s19, 2
        %s237 = scalar_lea.vmem %s2, %s236
        %p239 = scmp.eq.s32.totalorder %s19, 0
        // Predicated region
        $region41: #{tpu_custom_call.1} parent=35 // pred_check
          %p240 = pneg %p239
        $region42: #{tpu_custom_call.1} parent=35 // pred_check_branch
          %242 = sbr.rel (%p240) target = $region44
        $region43: #{tpu_custom_call.1} parent=35 // pred_region
          %v243 = vld [vmem:[%s3] sm:$0xff]
          %v244 = vld [vmem:[%s3 + $0x8] sm:$0xff]
          %245 = vst [vmem:[#allocation2] sm:$0xff] %v243
          %246 = vst [vmem:[#allocation2 + $0x8] sm:$0xff] %v244
        $region44: #{tpu_custom_call.1} parent=35 // pred_fallthru
          _
        %v247 = vld [vmem:[#allocation2] sm:$0xff]
        %v248 = vld [vmem:[#allocation2 + $0x8] sm:$0xff]
        %v249 = vpack.c.bf16 %v248, %v247
        %v250 = vld [vmem:[%s234] sm:$0xf]
        %v251 = vld [vmem:[%s234 + $0x4] sm:$0xf]
        %v252 = vld [vmem:[%s234 + $0x8] sm:$0xf]
        %v253 = vld [vmem:[%s234 + $0xc] sm:$0xf]
        %v258 = vunpack.c.l.b16 %v250
        %v259 = vunpack.c.l.b16 %v251
        %v260 = vunpack.c.l.b16 %v252
        %v261 = vunpack.c.l.b16 %v253
        %v262 = vpack.c.b16 %v259, %v258
        %v263 = vpack.c.b16 %v261, %v260
        %vm264 = vcmask 130048
        %v266 = vsel %vm264, %v262, 0
        %v269 = vsel %vm264, %v263, 0
        %271 = vmatprep.subr.bf16.mxu0 0
        %272 = vmatpush1.bf16.msra.mxu0 %v249
        %273 = vmatprep.subr.bf16.mxu0 0
        %274 = vmatpush1.bf16.msra.mxu0 0
        %275 = vmatprep.subr.bf16.mxu0 0
        %276 = vmatpush1.bf16.msra.mxu0 0
        %277 = vmatprep.subr.bf16.mxu0 0
        %278 = vmatpush1.bf16.msra.mxu0 0
        %279 = vmatprep.subr.bf16.mxu0 0
        %280 = vmatpush1.bf16.msra.mxu0 0
        %281 = vmatprep.subr.bf16.mxu0 0
        %282 = vmatpush1.bf16.msra.mxu0 0
        %283 = vmatprep.subr.bf16.mxu0 0
        %284 = vmatpush1.bf16.msra.mxu0 0
        %285 = vmatprep.subr.bf16.mxu0 0
        %286 = vmatpush1.bf16.msra.mxu0 0
        %287 = vmatprep.subr.bf16.mxu0 0
        %288 = vmatpush1.bf16.msra.mxu0 0
        %289 = vmatprep.subr.bf16.mxu0 0
        %290 = vmatpush1.bf16.msra.mxu0 0
        %291 = vmatprep.subr.bf16.mxu0 0
        %292 = vmatpush1.bf16.msra.mxu0 0
        %293 = vmatprep.subr.bf16.mxu0 0
        %294 = vmatpush1.bf16.msra.mxu0 0
        %295 = vmatprep.subr.bf16.mxu0 0
        %296 = vmatpush1.bf16.msra.mxu0 0
        %297 = vmatprep.subr.bf16.mxu0 0
        %298 = vmatpush1.bf16.msra.mxu0 0
        %299 = vmatprep.subr.bf16.mxu0 0
        %300 = vmatpush1.bf16.msra.mxu0 0
        %301 = vmatprep.subr.bf16.mxu0 0
        %302 = vmatpush1.bf16.msra.mxu0 0
        %303 = vmatprep.mubr.bf16.mxu0 0
        %304 = vmatmul.mubr.bf16.gmra.mrb[0].mxu0 %v266
        %v305 = vpop.f32.mrb[0].mxu0
        %v306 = vadd.f32 0.0, %v305
        %v307 = vpop.f32.mrb[0].mxu0
        %v308 = vpop.f32.mrb[0].mxu0
        %v309 = vadd.f32 0.0, %v308
        %v310 = vpop.f32.mrb[0].mxu0
        %311 = vmatprep.mubr.bf16.mxu0 0
        %312 = vmatmul.mubr.bf16.gmra.mrb[0].mxu0 %v269
        %v313 = vpop.f32.mrb[0].mxu0
        %v314 = vadd.f32 0.0, %v313
        %v315 = vpop.f32.mrb[0].mxu0
        %v316 = vpop.f32.mrb[0].mxu0
        %v317 = vadd.f32 0.0, %v316
        %v318 = vpop.f32.mrb[0].mxu0
        %319 = vdwg.mxu0
        %v320 = vpack.c.bf16 %v309, %v306
        %v321 = vld [vmem:[%s202] sm:$0xf]
        %v322 = vld [vmem:[%s202 + $0x4] sm:$0xf]
        %v323 = vld [vmem:[%s202 + $0x8] sm:$0xf]
        %v324 = vld [vmem:[%s202 + $0xc] sm:$0xf]
        %v325 = vld [vmem:[%s202 + $0x10] sm:$0xf]
        %v326 = vld [vmem:[%s202 + $0x14] sm:$0xf]
        %v327 = vld [vmem:[%s202 + $0x18] sm:$0xf]
        %v328 = vld [vmem:[%s202 + $0x1c] sm:$0xf]
        %v329 = vld [vmem:[%s202 + $0x20] sm:$0xf]
        %v330 = vld [vmem:[%s202 + $0x24] sm:$0xf]
        %v331 = vld [vmem:[%s202 + $0x28] sm:$0xf]
        %v332 = vld [vmem:[%s202 + $0x2c] sm:$0xf]
        %v333 = vld [vmem:[%s202 + $0x30] sm:$0xf]
        %v334 = vld [vmem:[%s202 + $0x34] sm:$0xf]
        %v335 = vld [vmem:[%s202 + $0x38] sm:$0xf]
        %v336 = vld [vmem:[%s202 + $0x3c] sm:$0xf]
        %v337 = vld [vmem:[%s237] sm:$0x1]
        %v339 = vlaneseq
        %v340 = vshrl.u32 %v339, 7
        %v341 = vsub.s32 0, %v340
        %v342 = vrot.slane %v337, %v341
        %v360 = vunpack.c.l.b16 %v321
        %v361 = vunpack.c.l.b16 %v322
        %v362 = vunpack.c.l.b16 %v323
        %v363 = vunpack.c.l.b16 %v324
        %v364 = vunpack.c.l.b16 %v325
        %v365 = vunpack.c.l.b16 %v326
        %v366 = vunpack.c.l.b16 %v327
        %v367 = vunpack.c.l.b16 %v328
        %v368 = vunpack.c.l.b16 %v329
        %v369 = vunpack.c.l.b16 %v330
        %v370 = vunpack.c.l.b16 %v331
        %v371 = vunpack.c.l.b16 %v332
        %v372 = vunpack.c.l.b16 %v333
        %v373 = vunpack.c.l.b16 %v334
        %v374 = vunpack.c.l.b16 %v335
        %v375 = vunpack.c.l.b16 %v336
        %v376 = vpack.c.b16 %v361, %v360
        %v377 = vpack.c.b16 %v363, %v362
        %v378 = vpack.c.b16 %v365, %v364
        %v379 = vpack.c.b16 %v367, %v366
        %v380 = vpack.c.b16 %v369, %v368
        %v381 = vpack.c.b16 %v371, %v370
        %v382 = vpack.c.b16 %v373, %v372
        %v383 = vpack.c.b16 %v375, %v374
        %392 = vmatprep.subr.bf16.mxu0 0
        %393 = vmatpush1.bf16.msra.mxu0 %v376
        %394 = vmatprep.subr.bf16.mxu0 0
        %395 = vmatpush1.bf16.msra.mxu0 %v377
        %396 = vmatprep.subr.bf16.mxu0 0
        %397 = vmatpush1.bf16.msra.mxu0 %v378
        %398 = vmatprep.subr.bf16.mxu0 0
        %399 = vmatpush1.bf16.msra.mxu0 %v379
        %400 = vmatprep.subr.bf16.mxu0 0
        %401 = vmatpush1.bf16.msra.mxu0 %v380
        %402 = vmatprep.subr.bf16.mxu0 0
        %403 = vmatpush1.bf16.msra.mxu0 %v381
        %404 = vmatprep.subr.bf16.mxu0 0
        %405 = vmatpush1.bf16.msra.mxu0 %v382
        %406 = vmatprep.subr.bf16.mxu0 0
        %407 = vmatpush1.bf16.msra.mxu0 %v383
        %408 = vmatprep.subr.bf16.mxu0 0
        %409 = vmatpush1.bf16.msra.mxu0 0
        %410 = vmatprep.subr.bf16.mxu0 0
        %411 = vmatpush1.bf16.msra.mxu0 0
        %412 = vmatprep.subr.bf16.mxu0 0
        %413 = vmatpush1.bf16.msra.mxu0 0
        %414 = vmatprep.subr.bf16.mxu0 0
        %415 = vmatpush1.bf16.msra.mxu0 0
        %416 = vmatprep.subr.bf16.mxu0 0
        %417 = vmatpush1.bf16.msra.mxu0 0
        %418 = vmatprep.subr.bf16.mxu0 0
        %419 = vmatpush1.bf16.msra.mxu0 0
        %420 = vmatprep.subr.bf16.mxu0 0
        %421 = vmatpush1.bf16.msra.mxu0 0
        %422 = vmatprep.subr.bf16.mxu0 0
        %423 = vmatpush1.bf16.msra.mxu0 0
        %424 = vmatprep.mubr.bf16.mxu0 0
        %425 = vmatmul.mubr.bf16.gmra.mrb[0].mxu0 %v320
        %v426 = vpop.f32.mrb[0].mxu0
        %v427 = vadd.f32 %v342, %v426
        %v428 = vpop.f32.mrb[0].mxu0
        %v429 = vpop.f32.mrb[0].mxu0
        %v430 = vadd.f32 %v342, %v429
        %v431 = vpop.f32.mrb[0].mxu0
        %432 = vdwg.mxu0
        %v433 = vmax.f32 %v427, 0.0
        %v434 = vmax.f32 %v430, 0.0
        %v435 = vadd.f32 %v433, %v314
        %v436 = vadd.f32 %v434, %v317
        %437 = vst [vmem:[#allocation2] sm:$0xff] %v435
        %438 = vst [vmem:[#allocation2 + $0x8] sm:$0xff] %v436
        %p439 = scmp.eq.s32.totalorder %s19, 2
        // Predicated region
        $region45: #{tpu_custom_call.1} parent=35 // pred_check
          %p440 = pneg %p439
        $region46: #{tpu_custom_call.1} parent=35 // pred_check_branch
          %442 = sbr.rel (%p440) target = $region48
        $region47: #{tpu_custom_call.1} parent=35 // pred_region
          %v443 = vld [vmem:[#allocation2] sm:$0xff]
          %v444 = vld [vmem:[#allocation2 + $0x8] sm:$0xff]
          %445 = vst [vmem:[#allocation6] sm:$0xff] %v443
          %446 = vst [vmem:[#allocation6 + $0x8] sm:$0xff] %v444
        $region48: #{tpu_custom_call.1} parent=35 // pred_fallthru
          _
        // Predicated region
        $region49: #{tpu_custom_call.1} parent=35 // pred_check
          %p447 = pneg %p131
        $region50: #{tpu_custom_call.1} parent=35 // pred_check_branch
          %449 = sbr.rel (%p447) target = $region52
        $region51: #{tpu_custom_call.1} parent=35 // pred_region
          %s451 = ssub.s32 256, 256
          %452 = vsyncadd [#allocation5], %s451
          %s453 = sshll.u32 [#allocation6], 4
          %s454 = int_to_ptr.vmem [resolvable:$true] %s453
          %459 = dma.vmem_to_hbm [thread:$0]  %s454, 256, %s4, [#allocation5], 128, 128, 8
        $region52: #{tpu_custom_call.1} parent=35 // pred_fallthru
          _
        // Predicated region
        $region53: #{tpu_custom_call.1} parent=35 // pred_check
          %p460 = pneg %p131
        $region54: #{tpu_custom_call.1} parent=35 // pred_check_branch
          %462 = sbr.rel (%p460) target = $region56
        $region55: #{tpu_custom_call.1} parent=35 // pred_region
          %463 = dma.done [#allocation5], 256
        $region56: #{tpu_custom_call.1} parent=35 // pred_fallthru
          _
      $region36: #{tpu_custom_call.1} parent=5 // pred_fallthru
        _
      %p464 = scmp.le.s32.totalorder 2, %s14
      // Predicated region
      $region57: #{tpu_custom_call.1} parent=5 // pred_check
        %p465 = pneg %p464
      $region58: #{tpu_custom_call.1} parent=5 // pred_check_branch
        %467 = sbr.rel (%p465) target = $region60
      $region59: #{tpu_custom_call.1} parent=5 // pred_region
        %s468 = ssub.s32 %s14, 2
      $region60: #{tpu_custom_call.1} parent=5 // pred_fallthru
        _
    $region6: #{tpu_custom_call.1} parent=1 // loop_footer
      %s18 = sadd.s32 1, %s14
    $region7: #{tpu_custom_call.1} parent=1 // loop_footer_branch
      %13 = sbr.rel target = $region3
    $region8: #{tpu_custom_call.1} parent=1 // loop_exit
      _
    %469 = vsyncpa [#allocation4], 1
    %s470 = scalar_lea.sflag [#allocation4], 1
    %471 = vsyncpa %s470, 1
    %472 = vsyncpa [#allocation5], 1
    %s473 = scalar_lea.sflag [#allocation5], 1
    %474 = vsyncpa %s473, 1

</llo_original>
